<compile_context>
chip_gen: v6e
topology: v6e:2x2x1
jax: 0.10.0
libtpu: 0.0.40
codegen_flags: <defaults>
</compile_context>

<pallas_src>
import numpy as np
import jax
import jax.numpy as jnp
from jax.experimental import pallas as pl
from jax.experimental.pallas import tpu as pltpu


def _round_up(x, m):
    return ((x + m - 1) // m) * m


# ---------------------------------------------------------------------------
# Pallas kernel: tiled argmax over the last (vocab) axis.
#   input  tile: (TR, TV) probs
#   output tile: (TR, 1)  int32 argmax (written once per row-tile, at last vj)
#   scratch    : running max (TR,1) f32, running argmax (TR,1) i32
# ---------------------------------------------------------------------------
def _argmax_kernel(x_ref, o_ref, max_ref, arg_ref):
    vj = pl.program_id(1)
    n_vj = pl.num_programs(1)

    @pl.when(vj == 0)
    def _init():
        max_ref[...] = jnp.full_like(max_ref, -jnp.inf)
        arg_ref[...] = jnp.zeros_like(arg_ref)

    x = x_ref[...].astype(jnp.float32)                      # (TR, TV)
    tv = x.shape[-1]

    tile_max = jnp.max(x, axis=-1, keepdims=True)           # (TR, 1)
    lane = jax.lax.broadcasted_iota(jnp.int32, x.shape, 1)  # (TR, TV)
    big = jnp.int32(np.iinfo(np.int32).max)
    # first index achieving the tile max (matches jnp/torch tie-break)
    tile_arg = jnp.min(jnp.where(x >= tile_max, lane, big),
                       axis=-1, keepdims=True)               # (TR, 1)

    run_max = max_ref[...]
    run_arg = arg_ref[...]
    newer = tile_max > run_max                               # strict > keeps first max
    arg_ref[...] = jnp.where(newer, tile_arg + vj * tv, run_arg)
    max_ref[...] = jnp.where(newer, tile_max, run_max)

    @pl.when(vj == n_vj - 1)
    def _store():
        o_ref[...] = arg_ref[...]


def pallas_argmax_lastdim(probs, *, row_tile=256, vocab_tile=1024):
    """argmax over the last axis of (B, T, V), computed with a tiled TPU kernel."""
    B, T, V = probs.shape
    rows = B * T
    x = probs.reshape(rows, V)

    # Tile sizes: lane tile multiple of 128, row tile multiple of 8.
    TV = min(vocab_tile, _round_up(V, 128))
    Vp = _round_up(V, TV)
    TR = min(row_tile, _round_up(rows, 8))
    Rp = _round_up(rows, TR)

    if (Rp != rows) or (Vp != V):
        # -inf padding: padded vocab columns can never win the argmax;
        # padded rows are sliced off afterwards.
        x = jnp.pad(x, ((0, Rp - rows), (0, Vp - V)),
                    constant_values=-jnp.inf)

    grid = (Rp // TR, Vp // TV)

    out = pl.pallas_call(
        _argmax_kernel,
        out_shape=jax.ShapeDtypeStruct((Rp, 1), jnp.int32),
        grid=grid,
        in_specs=[pl.BlockSpec((TR, TV), lambda i, j: (i, j))],
        out_specs=pl.BlockSpec((TR, 1), lambda i, j: (i, 0)),
        scratch_shapes=[pltpu.VMEM((TR, 1), jnp.float32),
                        pltpu.VMEM((TR, 1), jnp.int32)],
        compiler_params=pltpu.CompilerParams(
            dimension_semantics=("parallel", "arbitrary"),
            vmem_limit_bytes=32 * 1024 * 1024),
    )(x)

    return out[:rows, 0].reshape(B, T)


# ---------------------------------------------------------------------------
# Host-side tree parsing (faithful port of the PyTorch module's parsetree +
# a depth-first parenthesis lambda parser standing in for `tparse`).
# ---------------------------------------------------------------------------
def parse_lambda_depth_first_parentheses(s):
    tokens = s.split()
    pos = [0]

    def parse():
        if pos[0] >= len(tokens):
            return None
        tok = tokens[pos[0]]
        pos[0] += 1
        if tok == "(":
            children = []
            while pos[0] < len(tokens) and tokens[pos[0]] != ")":
                children.append(parse())
            if pos[0] < len(tokens):
                pos[0] += 1  # consume ')'
            return tuple(children)
        return tok

    return parse()


class TreeAccuracyLambdaDFPar:
    """JAX/Pallas port of the reference module (argmax on TPU, parsing on host)."""

    def __init__(self, flD, reduction="mean"):
        self.flD = flD                                # token -> id
        self.rflD = {v: k for k, v in flD.items()}    # id -> token
        self.parsef = parse_lambda_depth_first_parentheses
        self.masktoken = "<MASK>"
        self.reduction = reduction

    def _parsetree(self, row):
        row = np.asarray(row)
        tree = ["("] + [self.rflD[int(x)] for x in row
                        if self.rflD[int(x)] != self.masktoken]
        numunmatched = tree.count("(") - tree.count(")")
        tree += [")"] * max(0, numunmatched)
        if numunmatched < 0:
            depth = 0
            i = 0
            for i in range(len(tree)):
                if tree[i] == "(":
                    depth += 1
                elif tree[i] == ")":
                    depth -= 1
                    if depth == 0:
                        break
            tree = tree[: i + 1]
        return self.parsef(" ".join(tree))

    def forward(self, probs, gold):
        # TPU hot path: tiled argmax over the vocab axis.
        predseq = pallas_argmax_lastdim(probs)
        # TODO(synk): in a training loop, launch the next batch's argmax before
        #             this device_get to hide the host-side parsing latency.
        predseq_np = np.asarray(jax.device_get(predseq))
        gold_np = np.asarray(jax.device_get(gold))

        predtrees = [self._parsetree(prow) for prow in predseq_np]
        goldtrees = [self._parsetree(grow) for grow in gold_np]
        same = np.asarray(
            [float(x == y) for x, y in zip(goldtrees, predtrees)],
            dtype=np.float32)

        # Tiny per-batch reduction: done on host (a dedicated pallas_call costs
        # more in launch overhead than the work it performs).
        if self.reduction in ("mean", "elementwise_mean"):
            return jnp.float32(same.sum() / same.shape[0])
        if self.reduction == "sum":
            return jnp.float32(same.sum())
        return jnp.asarray(same)

    __call__ = forward


# ---------------------------------------------------------------------------
# Demo / self-test
# ---------------------------------------------------------------------------
if __name__ == "__main__":
    B, T, V = 2, 8, 16

    # Deterministic synthetic vocabulary (token -> id), as the module's flD.
    vocab = ["<MASK>", "(", ")", "lambda", "x", "f", "g", "a", "b",
             "and", "or", "not", "exists", "forall", "eq", "count"]
    assert len(vocab) == V
    flD = {tok: i for i, tok in enumerate(vocab)}

    key = jax.random.PRNGKey(0)
    k1, k2, k3 = jax.random.split(key, 3)
    probs = jax.random.normal(k1, (B, T, V), dtype=jnp.float32)
    gold = jax.random.randint(k2, (B, T), 0, V, dtype=jnp.int32)

    module = TreeAccuracyLambdaDFPar(flD, reduction="mean")
    out = jax.block_until_ready(module(probs, gold))

    # Check 1: kernel argmax matches jnp.argmax on the module inputs.
    np.testing.assert_array_equal(
        np.asarray(pallas_argmax_lastdim(probs)),
        np.asarray(jnp.argmax(probs, axis=2)))

    # Check 2: exercise real tiling — multiple row tiles, multiple vocab tiles,
    # and padding on both axes (rows=132 -> 192 @ TR=64, V=700 -> 768 @ TV=256).
    big = jax.random.normal(k3, (4, 33, 700), dtype=jnp.float32)
    np.testing.assert_array_equal(
        np.asarray(pallas_argmax_lastdim(big, row_tile=64, vocab_tile=256)),
        np.asarray(jnp.argmax(big, axis=2)))

    # Check 3: end-to-end value against a pure host reference.
    ref_pred = np.asarray(jnp.argmax(probs, 2))
    same_ref = np.asarray(
        [float(module._parsetree(g) == module._parsetree(p))
         for g, p in zip(np.asarray(gold), ref_pred)], dtype=np.float32)
    np.testing.assert_allclose(float(out), same_ref.mean(), rtol=1e-6, atol=1e-6)

    print("KERNEL_OK")
</pallas_src>

<mosaic_0001>
module attributes {stable_mosaic.version = 11 : i64} {
  func.func @_argmax_kernel(%arg0: i32, %arg1: i32, %arg2: memref<16x128xf32, #tpu.memory_space<vmem>>, %arg3: memref<16x1xi32, #tpu.memory_space<vmem>>, %arg4: memref<16x1xf32, #tpu.memory_space<vmem>>, %arg5: memref<16x1xi32, #tpu.memory_space<vmem>>) attributes {dimension_semantics = [#tpu.dimension_semantics<parallel>, #tpu.dimension_semantics<arbitrary>], iteration_bounds = array<i64: 1, 1>, scalar_prefetch = 0 : i64, scratch_operands = 2 : i64, tpu.core_type = #tpu.core_type<tc>, window_params = [{transform_indices = @transform_0, window_bounds = array<i64: 16, 128>}, {transform_indices = @transform_1, window_bounds = array<i64: 16, 1>}]} {
    %c0_i32 = arith.constant 0 : i32
    %0 = arith.cmpi eq, %arg1, %c0_i32 : i32
    %1 = arith.extui %0 : i1 to i32
    %c0_i32_0 = arith.constant 0 : i32
    %2 = arith.cmpi ne, %1, %c0_i32_0 : i32
    scf.if %2 {
      %cst_13 = arith.constant 0xFF800000 : f32
      %26 = vector.broadcast %cst_13 : f32 to vector<16x1xf32>
      %c0_14 = arith.constant 0 : index
      %c0_15 = arith.constant 0 : index
      %27 = vector.load %arg4[%c0_14, %c0_15] : memref<16x1xf32, #tpu.memory_space<vmem>>, vector<16x1xf32>
      tpu.vector_store %arg4[%c0_14, %c0_15], %26 {strides = array<i32>} : memref<16x1xf32, #tpu.memory_space<vmem>>, vector<16x1xf32>,
      %c0_i32_16 = arith.constant 0 : i32
      %28 = vector.broadcast %c0_i32_16 : i32 to vector<16x1xi32>
      %c0_17 = arith.constant 0 : index
      %c0_18 = arith.constant 0 : index
      %29 = vector.load %arg5[%c0_17, %c0_18] : memref<16x1xi32, #tpu.memory_space<vmem>>, vector<16x1xi32>
      tpu.vector_store %arg5[%c0_17, %c0_18], %28 {strides = array<i32>} : memref<16x1xi32, #tpu.memory_space<vmem>>, vector<16x1xi32>,
    } else {
    }
    %c0 = arith.constant 0 : index
    %c0_1 = arith.constant 0 : index
    %3 = vector.load %arg2[%c0, %c0_1] : memref<16x128xf32, #tpu.memory_space<vmem>>, vector<16x128xf32>
    %cst = arith.constant dense<0xFF800000> : vector<16xf32>
    %4 = vector.multi_reduction <maximumf>, %3, %cst [1] : vector<16x128xf32> to vector<16xf32>
    %5 = vector.shape_cast %4 : vector<16xf32> to vector<16x1xf32>
    %6 = tpu.iota {dimensions = array<i32: 1>} : vector<16x128xi32>
    %7 = vector.broadcast %5 : vector<16x1xf32> to vector<16x128xf32>
    %8 = arith.cmpf oge, %3, %7 : vector<16x128xf32>
    %c2147483647_i32 = arith.constant 2147483647 : i32
    %9 = vector.broadcast %c2147483647_i32 : i32 to vector<16x128xi32>
    %10 = arith.select %8, %6, %9 : vector<16x128xi1>, vector<16x128xi32>
    %cst_2 = arith.constant dense<2147483647> : vector<16xi32>
    %11 = vector.multi_reduction <minsi>, %10, %cst_2 [1] : vector<16x128xi32> to vector<16xi32>
    %12 = vector.shape_cast %11 : vector<16xi32> to vector<16x1xi32>
    %c0_3 = arith.constant 0 : index
    %c0_4 = arith.constant 0 : index
    %13 = vector.load %arg4[%c0_3, %c0_4] : memref<16x1xf32, #tpu.memory_space<vmem>>, vector<16x1xf32>
    %c0_5 = arith.constant 0 : index
    %c0_6 = arith.constant 0 : index
    %14 = vector.load %arg5[%c0_5, %c0_6] : memref<16x1xi32, #tpu.memory_space<vmem>>, vector<16x1xi32>
    %15 = arith.cmpf ogt, %5, %13 : vector<16x1xf32>
    %c128_i32 = arith.constant 128 : i32
    %16 = arith.muli %arg1, %c128_i32 : i32
    %17 = vector.broadcast %16 : i32 to vector<16x1xi32>
    %18 = arith.addi %12, %17 : vector<16x1xi32>
    %19 = arith.select %15, %18, %14 : vector<16x1xi1>, vector<16x1xi32>
    %c0_7 = arith.constant 0 : index
    %c0_8 = arith.constant 0 : index
    %20 = vector.load %arg5[%c0_7, %c0_8] : memref<16x1xi32, #tpu.memory_space<vmem>>, vector<16x1xi32>
    tpu.vector_store %arg5[%c0_7, %c0_8], %19 {strides = array<i32>} : memref<16x1xi32, #tpu.memory_space<vmem>>, vector<16x1xi32>,
    %21 = arith.select %15, %5, %13 : vector<16x1xi1>, vector<16x1xf32>
    %c0_9 = arith.constant 0 : index
    %c0_10 = arith.constant 0 : index
    %22 = vector.load %arg4[%c0_9, %c0_10] : memref<16x1xf32, #tpu.memory_space<vmem>>, vector<16x1xf32>
    tpu.vector_store %arg4[%c0_9, %c0_10], %21 {strides = array<i32>} : memref<16x1xf32, #tpu.memory_space<vmem>>, vector<16x1xf32>,
    %c0_i32_11 = arith.constant 0 : i32
    %23 = arith.cmpi eq, %arg1, %c0_i32_11 : i32
    %24 = arith.extui %23 : i1 to i32
    %c0_i32_12 = arith.constant 0 : i32
    %25 = arith.cmpi ne, %24, %c0_i32_12 : i32
    scf.if %25 {
      %c0_13 = arith.constant 0 : index
      %c0_14 = arith.constant 0 : index
      %26 = vector.load %arg5[%c0_13, %c0_14] : memref<16x1xi32, #tpu.memory_space<vmem>>, vector<16x1xi32>
      %c0_15 = arith.constant 0 : index
      %c0_16 = arith.constant 0 : index
      %27 = vector.load %arg3[%c0_15, %c0_16] : memref<16x1xi32, #tpu.memory_space<vmem>>, vector<16x1xi32>
      tpu.vector_store %arg3[%c0_15, %c0_16], %26 {strides = array<i32>} : memref<16x1xi32, #tpu.memory_space<vmem>>, vector<16x1xi32>,
    } else {
    }
    return
  }
  func.func @transform_0(%arg0: i32, %arg1: i32) -> (i32, i32) {
    %c0_i32 = arith.constant 0 : i32
    return %arg0, %arg1 : i32, i32
  }
  func.func @transform_1(%arg0: i32, %arg1: i32) -> (i32, i32) {
    %c0_i32 = arith.constant 0 : i32
    %c0_i32_0 = arith.constant 0 : i32
    return %arg0, %c0_i32 : i32, i32
  }
}

</mosaic_0001>

<llo_original>
// kernel: tpu_custom_call.1
$region0: #{tpu_custom_call.1}
  #allocation0 [shape = 'u32[]', space=smem, size = 0x4, offset = 0x4, fixed_abs, tag = 'smem constant byte address 0x4 - core index']
  #allocation1 [shape = 'u32[144,128]{1,0:T(1,128)}', space=vmem, size = 0x12000, scoped, tag = 'internal scratch']
  #allocation2 [shape = 'f32[16,1]{1,0:T(8,128)}', space=vmem, size = 0x2000, scoped, tag = 'scratch operand']
  #allocation3 [shape = 's32[16,1]{1,0:T(8,128)}', space=vmem, size = 0x2000, scoped, tag = 'scratch operand']
  %s0 = inlined_call_operand.hbm [shape: f32[16,128], index: 0, kind: input, shape index: {}]
  %s1 = inlined_call_operand.vmem [shape: s32[16,1], index: 1, kind: output, shape index: {}]
  %s2 = sld [smem:[#allocation0]]
  $region26: #{tpu_custom_call.1} parent=0
    _
  %s4 = ssub.s32 1, %s2
  %s5 = scalar_select 0, %s4, %s2
  $region1: #{tpu_custom_call.1} parent=0
    #allocation4 [shape = 'u8[8192]{0}', space=vmem, size = 0x2000, scoped, tag = 'input window, operand 0, single buffered']
    #allocation5 [shape = 's32[1]{0}', space=sflag, size = 0x4, scoped, tag = 'scoped memory for tpu_custom_call.1']
    %6 = vsyncpa [#allocation5], 0
    // Predicated region
    $region2: #{tpu_custom_call.1} parent=1 // pred_check
      _
    $region3: #{tpu_custom_call.1} parent=1 // pred_check_branch
      %8 = sbr.rel (0) target = $region5
    $region4: #{tpu_custom_call.1} parent=1 // pred_region
      %s10 = ssub.s32 256, 256
      %11 = vsyncadd [#allocation5], %s10
      %s12 = sshll.u32 [#allocation4], 4
      %s13 = int_to_ptr.vmem [resolvable:$true] %s12
      %18 = dma.hbm_to_vmem [thread:$0]  %s0, 256, %s13, [#allocation5], 128, 128, 8
    $region5: #{tpu_custom_call.1} parent=1 // pred_fallthru
      _
    // Predicated region
    $region6: #{tpu_custom_call.1} parent=1 // pred_check
      _
    $region7: #{tpu_custom_call.1} parent=1 // pred_check_branch
      %20 = sbr.rel (0) target = $region9
    $region8: #{tpu_custom_call.1} parent=1 // pred_region
      %21 = dma.done [#allocation5], 256
    $region9: #{tpu_custom_call.1} parent=1 // pred_fallthru
      _
    %p22 = scmp.eq.s32.totalorder 0, 0
    // Predicated region
    $region10: #{tpu_custom_call.1} parent=1 // pred_check
      %p23 = pneg %p22
    $region11: #{tpu_custom_call.1} parent=1 // pred_check_branch
      %25 = sbr.rel (%p23) target = $region13
    $region12: #{tpu_custom_call.1} parent=1 // pred_region
      %vm26 = vcmask 7168
      %27 = vst.msk [vmem:[#allocation2] sm:$0xff] %vm26, -inf
      %28 = vst.msk [vmem:[#allocation2 + $0x8] sm:$0xff] %vm26, -inf
      %29 = vst.msk [vmem:[#allocation3] sm:$0xff] %vm26, 0
      %30 = vst.msk [vmem:[#allocation3 + $0x8] sm:$0xff] %vm26, 0
    $region13: #{tpu_custom_call.1} parent=1 // pred_fallthru
      _
    %v31 = vld [vmem:[#allocation4] sm:$0xff]
    %v32 = vld [vmem:[#allocation4 + $0x8] sm:$0xff]
    %33 = vmax.xlane.f32.xlu0 %v31
    %v34 = vpop.xlane.xlu0 %33
    %35 = vmax.xlane.f32.xlu0 %v32
    %v36 = vpop.xlane.xlu0 %35
    %v37 = vlaneseq
    %v38 = vand.u32 %v37, 127
    %vm39 = vcmp.ge.f32.partialorder %v31, %v34
    %vm40 = vcmp.ge.f32.partialorder %v32, %v36
    %v41 = vsel %vm39, %v38, 2147483647
    %v42 = vsel %vm40, %v38, 2147483647
    %v43 = vand.u32 %v41, 65535
    %v44 = vshra.s32 %v41, 16
    %v45 = vcvt.s32.f32 %v43
    %v46 = vcvt.s32.f32 %v44
    %47 = vmin.xlane.f32.xlu0 %v46
    %v48 = vpop.xlane.xlu0 %47
    %vm49 = vcmp.eq.f32.partialorder %v46, %v48
    %v50 = vsel %vm49, %v45, inf
    %51 = vmin.xlane.f32.xlu0 %v50
    %v52 = vpop.xlane.xlu0 %51
    %v53 = vcvt.f32.s32 %v52
    %v54 = vcvt.f32.s32 %v48
    %v55 = vshll.u32 %v54, 16
    %v56 = vadd.s32 %v55, %v53
    %v57 = vand.u32 %v42, 65535
    %v58 = vshra.s32 %v42, 16
    %v59 = vcvt.s32.f32 %v57
    %v60 = vcvt.s32.f32 %v58
    %61 = vmin.xlane.f32.xlu0 %v60
    %v62 = vpop.xlane.xlu0 %61
    %vm63 = vcmp.eq.f32.partialorder %v60, %v62
    %v64 = vsel %vm63, %v59, inf
    %65 = vmin.xlane.f32.xlu0 %v64
    %v66 = vpop.xlane.xlu0 %65
    %v67 = vcvt.f32.s32 %v66
    %v68 = vcvt.f32.s32 %v62
    %v69 = vshll.u32 %v68, 16
    %v70 = vadd.s32 %v69, %v67
    %v71 = vld [vmem:[#allocation2] sm:$0xff]
    %v72 = vld [vmem:[#allocation2 + $0x8] sm:$0xff]
    %v73 = vld [vmem:[#allocation3] sm:$0xff]
    %v74 = vld [vmem:[#allocation3 + $0x8] sm:$0xff]
    %vm75 = vcmp.gt.f32.partialorder %v34, %v71
    %vm76 = vcmp.gt.f32.partialorder %v36, %v72
    %s77 = smul.u32 0, 128
    %v78 = vstv %s77
    %v79 = vadd.s32 %v56, %v78
    %v80 = vadd.s32 %v70, %v78
    %v81 = vsel %vm75, %v79, %v73
    %v82 = vsel %vm76, %v80, %v74
    %vm83 = vcmask 7168
    %84 = vst.msk [vmem:[#allocation3] sm:$0xff] %vm83, %v81
    %85 = vst.msk [vmem:[#allocation3 + $0x8] sm:$0xff] %vm83, %v82
    %v86 = vsel %vm75, %v34, %v71
    %v87 = vsel %vm76, %v36, %v72
    %88 = vst.msk [vmem:[#allocation2] sm:$0xff] %vm83, %v86
    %89 = vst.msk [vmem:[#allocation2 + $0x8] sm:$0xff] %vm83, %v87
    // Predicated region
    $region14: #{tpu_custom_call.1} parent=1 // pred_check
      %p90 = pneg %p22
    $region15: #{tpu_custom_call.1} parent=1 // pred_check_branch
      %92 = sbr.rel (%p90) target = $region17
    $region16: #{tpu_custom_call.1} parent=1 // pred_region
      %v93 = vld [vmem:[#allocation3] sm:$0xff]
      %v94 = vld [vmem:[#allocation3 + $0x8] sm:$0xff]
      %95 = vst.msk [vmem:[%s1] sm:$0xff] %vm83, %v93
      %96 = vst.msk [vmem:[%s1 + $0x8] sm:$0xff] %vm83, %v94
    $region17: #{tpu_custom_call.1} parent=1 // pred_fallthru
      _
    // Predicated region
    $region18: #{tpu_custom_call.1} parent=1 // pred_check
      _
    $region19: #{tpu_custom_call.1} parent=1 // pred_check_branch
      %98 = sbr.rel (0) target = $region21
    $region20: #{tpu_custom_call.1} parent=1 // pred_region
      _
    $region21: #{tpu_custom_call.1} parent=1 // pred_fallthru
      _
    // Predicated region
    $region22: #{tpu_custom_call.1} parent=1 // pred_check
      _
    $region23: #{tpu_custom_call.1} parent=1 // pred_check_branch
      %100 = sbr.rel (0) target = $region25
    $region24: #{tpu_custom_call.1} parent=1 // pred_region
      _
    $region25: #{tpu_custom_call.1} parent=1 // pred_fallthru
      _
    %101 = vsyncpa [#allocation5], 1

</llo_original>
